<compile_context>
chip_gen: v7x
topology: tpu7x:2x2x1
jax: 0.10.0
libtpu: 0.0.40
codegen_flags: <defaults>
</compile_context>

<pallas_src>
import jax
import jax.numpy as jnp
from jax.experimental import pallas as pl
from jax.experimental.pallas import tpu as pltpu

HIDDEN_PAD = 128      # 100 -> 128 lanes
ACTIONS_PAD = 128     # n_actions -> 128 lanes (lane-dense, unmasked stores)
NEG_INF = -1e30       # bias of padded action lanes (exp underflows to exactly 0)


def actor_kernel(x_ref, w1_ref, b1_ref, w2_ref, b2_ref, probs_ref):
    # Cast activations to bf16 only for the MXU; accumulate in f32.
    x = x_ref[...].astype(jnp.bfloat16)
    h = jnp.dot(x, w1_ref[...], preferred_element_type=jnp.float32) + b1_ref[...]
    # LeakyReLU(negative_slope=0.2) in f32 on the VPU.
    h = jnp.where(h > 0, h, 0.2 * h)
    logits = jnp.dot(h.astype(jnp.bfloat16), w2_ref[...],
                     preferred_element_type=jnp.float32) + b2_ref[...]
    # Numerically stable softmax over the 128 padded lanes.  Padded lanes carry
    # a -1e30 bias, so exp underflows to exactly 0 -> zero probability.
    m = jnp.max(logits, axis=-1, keepdims=True)
    e = jnp.exp(logits - m)
    s = jnp.sum(e, axis=-1, keepdims=True)
    probs_ref[...] = (e / s).astype(probs_ref.dtype)   # exact normalization


def _round_up(x, m):
    return ((x + m - 1) // m) * m


def pad_actor_params(w1, b1, w2, b2,
                     hidden_pad=HIDDEN_PAD, actions_pad=ACTIONS_PAD):
    """One-time padding + bf16 cast of the weights to lane-dense shapes.

    Padded hidden columns/rows are zero (contribute nothing); padded action
    lanes of b2 are -1e30 so the in-kernel softmax assigns them 0 probability.
    """
    d, h = w1.shape
    _, a = w2.shape
    w1p = jnp.zeros((d, hidden_pad), jnp.bfloat16).at[:, :h].set(
        w1.astype(jnp.bfloat16))
    b1p = jnp.zeros((1, hidden_pad), jnp.float32).at[:, :h].set(b1)
    w2p = jnp.zeros((hidden_pad, actions_pad), jnp.bfloat16).at[:h, :a].set(
        w2.astype(jnp.bfloat16))
    b2p = jnp.full((1, actions_pad), NEG_INF, jnp.float32).at[:, :a].set(b2)
    return w1p, b1p, w2p, b2p


def actor_forward(state, w1p, b1p, w2p, b2p):
    """Actor MLP + softmax in one Pallas kernel, tiled over batch rows.

    Returns the lane-dense [batch, 128] probability slab; lanes >= n_actions
    are exactly 0, so consumers simply index lanes 0..n_actions-1.
    """
    batch, d = state.shape
    hidden_pad = w1p.shape[1]
    actions_pad = w2p.shape[1]

    # Up to 512 rows per grid step (multiple of 16 for bf16 sublane packing):
    # large enough to amortize per-step pipeline overhead and feed the 256-wide
    # MXU on v6e/v7x; batches > 512 rows give >= 2 "parallel" grid steps so
    # both v7x TensorCores participate.  The ragged last block (or a single
    # partial block for tiny batches) is masked by Pallas on writeback.
    block_b = min(512, _round_up(batch, 16))
    grid = (pl.cdiv(batch, block_b),)

    return pl.pallas_call(
        actor_kernel,
        out_shape=jax.ShapeDtypeStruct((batch, actions_pad), jnp.float32),
        grid=grid,
        in_specs=[
            pl.BlockSpec((block_b, d), lambda i: (i, 0)),               # state rows
            pl.BlockSpec((d, hidden_pad), lambda i: (0, 0)),            # W1 (resident)
            pl.BlockSpec((1, hidden_pad), lambda i: (0, 0)),            # b1
            pl.BlockSpec((hidden_pad, actions_pad), lambda i: (0, 0)),  # W2 (resident)
            pl.BlockSpec((1, actions_pad), lambda i: (0, 0)),           # b2
        ],
        out_specs=pl.BlockSpec((block_b, actions_pad), lambda i: (i, 0)),
        compiler_params=pltpu.CompilerParams(
            dimension_semantics=("parallel",),   # batch rows are independent
        ),
    )(state, w1p, b1p, w2p, b2p)


def init_actor_params(key, input_dim, hidden, n_actions):
    """Deterministic init mimicking PyTorch nn.Linear defaults:
    U(-1/sqrt(fan_in), 1/sqrt(fan_in)) for both weight and bias.
    Stored as [in, out] so the kernel computes x @ W + b."""
    k1, k2, k3, k4 = jax.random.split(key, 4)
    bound1 = 1.0 / jnp.sqrt(jnp.float32(input_dim))
    bound2 = 1.0 / jnp.sqrt(jnp.float32(hidden))
    w1 = jax.random.uniform(k1, (input_dim, hidden), jnp.float32, -bound1, bound1)
    b1 = jax.random.uniform(k2, (1, hidden), jnp.float32, -bound1, bound1)
    w2 = jax.random.uniform(k3, (hidden, n_actions), jnp.float32, -bound2, bound2)
    b2 = jax.random.uniform(k4, (1, n_actions), jnp.float32, -bound2, bound2)
    return w1, b1, w2, b2


if __name__ == "__main__":
    # Small shapes consistent with the module: input_dims=(32,), n_actions=4.
    batch = 8
    input_dim = 32
    hidden = 100
    n_actions = 4

    key = jax.random.PRNGKey(0)
    k_state, k_params = jax.random.split(key)

    state = jax.random.normal(k_state, (batch, input_dim), dtype=jnp.float32)
    w1, b1, w2, b2 = init_actor_params(k_params, input_dim, hidden, n_actions)
    w1p, b1p, w2p, b2p = pad_actor_params(w1, b1, w2, b2)

    probs_slab = jax.block_until_ready(actor_forward(state, w1p, b1p, w2p, b2p))
    probs = probs_slab[:, :n_actions]      # view for verification only

    # Reference 1: same math with matching bf16 matmul operands (tight check).
    xb = state.astype(jnp.bfloat16)
    h_ref = jnp.dot(xb, w1.astype(jnp.bfloat16),
                    preferred_element_type=jnp.float32) + b1
    h_ref = jnp.where(h_ref > 0, h_ref, 0.2 * h_ref)
    logits_ref = jnp.dot(h_ref.astype(jnp.bfloat16), w2.astype(jnp.bfloat16),
                         preferred_element_type=jnp.float32) + b2
    probs_ref_bf16 = jax.nn.softmax(logits_ref, axis=-1)

    # Reference 2: full-f32 math (loose check, bounds bf16 rounding error).
    h32 = state @ w1 + b1
    h32 = jnp.where(h32 > 0, h32, 0.2 * h32)
    probs_ref_f32 = jax.nn.softmax(h32 @ w2 + b2, axis=-1)

    assert probs_slab.shape == (batch, ACTIONS_PAD)
    assert bool(jnp.all(probs_slab[:, n_actions:] < 1e-20)), "padded lanes not ~0"
    assert jnp.allclose(jnp.sum(probs, axis=-1), 1.0, atol=1e-4), "rows not normalized"
    assert jnp.allclose(probs, probs_ref_bf16, atol=2e-3), "mismatch vs bf16 reference"
    assert jnp.allclose(probs, probs_ref_f32, atol=5e-2), "mismatch vs f32 reference"

    # TODO(synk): Categorical sampling / log_prob / entropy (and the Adam
    # optimizer + checkpoint I/O of the PyTorch module) stay outside the kernel
    # in plain JAX; the kernel returns the probability slab.
    print("KERNEL_OK")
</pallas_src>

<mosaic_0001>
module attributes {stable_mosaic.version = 11 : i64} {
  func.func @actor_kernel(%arg0: i32, %arg1: memref<16x32xf32, #tpu.memory_space<vmem>>, %arg2: memref<32x128xbf16, #tpu.memory_space<vmem>>, %arg3: memref<1x128xf32, #tpu.memory_space<vmem>>, %arg4: memref<128x128xbf16, #tpu.memory_space<vmem>>, %arg5: memref<1x128xf32, #tpu.memory_space<vmem>>, %arg6: memref<16x128xf32, #tpu.memory_space<vmem>>) attributes {dimension_semantics = [#tpu.dimension_semantics<parallel>], iteration_bounds = array<i64: 1>, scalar_prefetch = 0 : i64, scratch_operands = 0 : i64, tpu.core_type = #tpu.core_type<tc>, window_params = [{transform_indices = @transform_0, window_bounds = array<i64: 16, 32>}, {pipeline_mode = #tpu.pipeline_mode<synchronous>, transform_indices = @transform_1, window_bounds = array<i64: 32, 128>}, {pipeline_mode = #tpu.pipeline_mode<synchronous>, transform_indices = @transform_2, window_bounds = array<i64: 1, 128>}, {pipeline_mode = #tpu.pipeline_mode<synchronous>, transform_indices = @transform_3, window_bounds = array<i64: 128, 128>}, {pipeline_mode = #tpu.pipeline_mode<synchronous>, transform_indices = @transform_4, window_bounds = array<i64: 1, 128>}, {transform_indices = @transform_5, window_bounds = array<i64: 16, 128>}]} {
    %c0 = arith.constant 0 : index
    %c0_0 = arith.constant 0 : index
    %0 = vector.load %arg1[%c0, %c0_0] : memref<16x32xf32, #tpu.memory_space<vmem>>, vector<16x32xf32>
    %1 = arith.truncf %0 : vector<16x32xf32> to vector<16x32xbf16>
    %c0_1 = arith.constant 0 : index
    %c0_2 = arith.constant 0 : index
    %2 = vector.load %arg2[%c0_1, %c0_2] : memref<32x128xbf16, #tpu.memory_space<vmem>>, vector<32x128xbf16>
    %cst = arith.constant dense<0.000000e+00> : vector<16x128xf32>
    %3 = tpu.matmul %1, %2, %cst {dimension_numbers = #tpu.dot_dimension_numbers<[1], [0], [0], [1], [0, 0, 1, 1], [], []>} : vector<16x32xbf16>, vector<32x128xbf16>, vector<16x128xf32> -> vector<16x128xf32>
    %c0_3 = arith.constant 0 : index
    %c0_4 = arith.constant 0 : index
    %4 = vector.load %arg3[%c0_3, %c0_4] : memref<1x128xf32, #tpu.memory_space<vmem>>, vector<1x128xf32>
    %5 = vector.broadcast %4 : vector<1x128xf32> to vector<16x128xf32>
    %6 = arith.addf %3, %5 : vector<16x128xf32>
    %cst_5 = arith.constant 0.000000e+00 : f32
    %7 = vector.broadcast %cst_5 : f32 to vector<16x128xf32>
    %8 = arith.cmpf ogt, %6, %7 : vector<16x128xf32>
    %cst_6 = arith.constant 2.000000e-01 : f32
    %9 = vector.broadcast %cst_6 : f32 to vector<16x128xf32>
    %10 = arith.mulf %9, %6 : vector<16x128xf32>
    %11 = arith.select %8, %6, %10 : vector<16x128xi1>, vector<16x128xf32>
    %12 = arith.truncf %11 : vector<16x128xf32> to vector<16x128xbf16>
    %c0_7 = arith.constant 0 : index
    %c0_8 = arith.constant 0 : index
    %13 = vector.load %arg4[%c0_7, %c0_8] : memref<128x128xbf16, #tpu.memory_space<vmem>>, vector<128x128xbf16>
    %cst_9 = arith.constant dense<0.000000e+00> : vector<16x128xf32>
    %14 = tpu.matmul %12, %13, %cst_9 {dimension_numbers = #tpu.dot_dimension_numbers<[1], [0], [0], [1], [0, 0, 1, 1], [], []>} : vector<16x128xbf16>, vector<128x128xbf16>, vector<16x128xf32> -> vector<16x128xf32>
    %c0_10 = arith.constant 0 : index
    %c0_11 = arith.constant 0 : index
    %15 = vector.load %arg5[%c0_10, %c0_11] : memref<1x128xf32, #tpu.memory_space<vmem>>, vector<1x128xf32>
    %16 = vector.broadcast %15 : vector<1x128xf32> to vector<16x128xf32>
    %17 = arith.addf %14, %16 : vector<16x128xf32>
    %cst_12 = arith.constant dense<0xFF800000> : vector<16xf32>
    %18 = vector.multi_reduction <maximumf>, %17, %cst_12 [1] : vector<16x128xf32> to vector<16xf32>
    %19 = vector.shape_cast %18 : vector<16xf32> to vector<16x1xf32>
    %20 = vector.broadcast %19 : vector<16x1xf32> to vector<16x128xf32>
    %21 = arith.subf %17, %20 : vector<16x128xf32>
    %22 = math.exp %21 : vector<16x128xf32>
    %cst_13 = arith.constant dense<0.000000e+00> : vector<16xf32>
    %23 = vector.multi_reduction <add>, %22, %cst_13 [1] : vector<16x128xf32> to vector<16xf32>
    %24 = vector.shape_cast %23 : vector<16xf32> to vector<16x1xf32>
    %25 = vector.broadcast %24 : vector<16x1xf32> to vector<16x128xf32>
    %26 = arith.divf %22, %25 : vector<16x128xf32>
    %c0_14 = arith.constant 0 : index
    %c0_15 = arith.constant 0 : index
    %27 = vector.load %arg6[%c0_14, %c0_15] : memref<16x128xf32, #tpu.memory_space<vmem>>, vector<16x128xf32>
    tpu.vector_store %arg6[%c0_14, %c0_15], %26 {strides = array<i32>} : memref<16x128xf32, #tpu.memory_space<vmem>>, vector<16x128xf32>,
    return
  }
  func.func @transform_0(%arg0: i32) -> (i32, i32) {
    %c0_i32 = arith.constant 0 : i32
    %c0_i32_0 = arith.constant 0 : i32
    return %arg0, %c0_i32 : i32, i32
  }
  func.func @transform_1(%arg0: i32) -> (i32, i32) {
    %c0_i32 = arith.constant 0 : i32
    %c0_i32_0 = arith.constant 0 : i32
    %c0_i32_1 = arith.constant 0 : i32
    return %c0_i32, %c0_i32_0 : i32, i32
  }
  func.func @transform_2(%arg0: i32) -> (i32, i32) {
    %c0_i32 = arith.constant 0 : i32
    %c0_i32_0 = arith.constant 0 : i32
    %c0_i32_1 = arith.constant 0 : i32
    return %c0_i32, %c0_i32_0 : i32, i32
  }
  func.func @transform_3(%arg0: i32) -> (i32, i32) {
    %c0_i32 = arith.constant 0 : i32
    %c0_i32_0 = arith.constant 0 : i32
    %c0_i32_1 = arith.constant 0 : i32
    return %c0_i32, %c0_i32_0 : i32, i32
  }
  func.func @transform_4(%arg0: i32) -> (i32, i32) {
    %c0_i32 = arith.constant 0 : i32
    %c0_i32_0 = arith.constant 0 : i32
    %c0_i32_1 = arith.constant 0 : i32
    return %c0_i32, %c0_i32_0 : i32, i32
  }
  func.func @transform_5(%arg0: i32) -> (i32, i32) {
    %c0_i32 = arith.constant 0 : i32
    %c0_i32_0 = arith.constant 0 : i32
    return %arg0, %c0_i32 : i32, i32
  }
}

</mosaic_0001>

<llo_original>
// kernel: tpu_custom_call.1
$region0: #{tpu_custom_call.1}
  #allocation0 [shape = 'u32[]', space=smem, size = 0x4, offset = 0x4, fixed_abs, tag = 'smem constant byte address 0x4 - core index']
  #allocation1 [shape = 'u32[144,128]{1,0:T(1,128)}', space=vmem, size = 0x12000, scoped, tag = 'internal scratch']
  %s0 = inlined_call_operand.hbm [shape: f32[8,32], index: 0, kind: input, shape index: {}]
  %s1 = inlined_call_operand.hbm [shape: bf16[32,128], index: 1, kind: input, shape index: {}]
  %s2 = inlined_call_operand.vmem [shape: f32[1,128], index: 2, kind: input, shape index: {}]
  %s3 = inlined_call_operand.hbm [shape: bf16[128,128], index: 3, kind: input, shape index: {}]
  %s4 = inlined_call_operand.vmem [shape: f32[1,128], index: 4, kind: input, shape index: {}]
  %s5 = inlined_call_operand.hbm [shape: f32[8,128], index: 5, kind: output, shape index: {}]
  %s6 = sld [smem:[#allocation0]]
  $region42: #{tpu_custom_call.1} parent=0
    _
  %s8 = ssub.s32 1, %s6
  %s9 = scalar_select 0, %s8, %s6
  $region1: #{tpu_custom_call.1} parent=0
    #allocation2 [shape = 'u8[8192]{0}', space=vmem, size = 0x2000, scoped, tag = 'input window, operand 0, single buffered']
    #allocation3 [shape = 's32[1]{0}', space=sflag, size = 0x4, scoped, tag = 'scoped memory for tpu_custom_call.1']
    #allocation4 [shape = 's32[1]{0}', space=sflag, size = 0x4, scoped, tag = 'scoped memory for tpu_custom_call.1']
    #allocation5 [shape = 'u8[8192]{0}', space=vmem, size = 0x2000, scoped, tag = 'input window, operand 1, single buffered']
    #allocation6 [shape = 's32[1]{0}', space=sflag, size = 0x4, scoped, tag = 'scoped memory for tpu_custom_call.1']
    #allocation7 [shape = 'u8[32768]{0}', space=vmem, size = 0x8000, scoped, tag = 'input window, operand 3, single buffered']
    #allocation8 [shape = 'u8[8192]{0}', space=vmem, size = 0x2000, scoped, tag = 'output window, operand 0, single buffered']
    %10 = vsyncpa [#allocation3], 0
    %11 = vsyncpa [#allocation6], 0
    %12 = vsyncpa [#allocation4], 0
    // Predicated region
    $region2: #{tpu_custom_call.1} parent=1 // pred_check
      _
    $region3: #{tpu_custom_call.1} parent=1 // pred_check_branch
      %14 = sbr.rel (0) target = $region5
    $region4: #{tpu_custom_call.1} parent=1 // pred_region
      %s16 = ssub.s32 256, 128
      %17 = vsyncadd [#allocation3], %s16
      %s18 = sshll.u32 [#allocation2], 4
      %s19 = int_to_ptr.vmem [resolvable:$true] %s18
      %24 = dma.hbm_to_vmem [thread:$0]  %s0, 128, %s19, [#allocation3], 128, 128, 8
    $region5: #{tpu_custom_call.1} parent=1 // pred_fallthru
      _
    // Predicated region
    $region6: #{tpu_custom_call.1} parent=1 // pred_check
      _
    $region7: #{tpu_custom_call.1} parent=1 // pred_check_branch
      %26 = sbr.rel (0) target = $region9
    $region8: #{tpu_custom_call.1} parent=1 // pred_region
      %s28 = ssub.s32 256, 256
      %29 = vsyncadd [#allocation6], %s28
      %s30 = sshll.u32 [#allocation5], 4
      %s31 = int_to_ptr.vmem [resolvable:$true] %s30
      %36 = dma.hbm_to_vmem [thread:$0]  %s1, 256, %s31, [#allocation6], 64, 64, 4
    $region9: #{tpu_custom_call.1} parent=1 // pred_fallthru
      _
    // Predicated region
    $region10: #{tpu_custom_call.1} parent=1 // pred_check
      _
    $region11: #{tpu_custom_call.1} parent=1 // pred_check_branch
      %38 = sbr.rel (0) target = $region13
    $region12: #{tpu_custom_call.1} parent=1 // pred_region
      _
    $region13: #{tpu_custom_call.1} parent=1 // pred_fallthru
      _
    // Predicated region
    $region14: #{tpu_custom_call.1} parent=1 // pred_check
      _
    $region15: #{tpu_custom_call.1} parent=1 // pred_check_branch
      %40 = sbr.rel (0) target = $region17
    $region16: #{tpu_custom_call.1} parent=1 // pred_region
      %s42 = ssub.s32 1024, 1024
      %43 = vsyncadd [#allocation6], %s42
      %s44 = sshll.u32 [#allocation7], 4
      %s45 = int_to_ptr.vmem [resolvable:$true] %s44
      %50 = dma.hbm_to_vmem [thread:$0]  %s3, 1024, %s45, [#allocation6], 64, 64, 4
    $region17: #{tpu_custom_call.1} parent=1 // pred_fallthru
      _
    // Predicated region
    $region18: #{tpu_custom_call.1} parent=1 // pred_check
      _
    $region19: #{tpu_custom_call.1} parent=1 // pred_check_branch
      %52 = sbr.rel (0) target = $region21
    $region20: #{tpu_custom_call.1} parent=1 // pred_region
      _
    $region21: #{tpu_custom_call.1} parent=1 // pred_fallthru
      _
    // Predicated region
    $region22: #{tpu_custom_call.1} parent=1 // pred_check
      _
    $region23: #{tpu_custom_call.1} parent=1 // pred_check_branch
      %54 = sbr.rel (0) target = $region25
    $region24: #{tpu_custom_call.1} parent=1 // pred_region
      %55 = dma.done [#allocation3], 256
    $region25: #{tpu_custom_call.1} parent=1 // pred_fallthru
      _
    // Predicated region
    $region26: #{tpu_custom_call.1} parent=1 // pred_check
      _
    $region27: #{tpu_custom_call.1} parent=1 // pred_check_branch
      %57 = sbr.rel (0) target = $region29
    $region28: #{tpu_custom_call.1} parent=1 // pred_region
      %58 = dma.done [#allocation6], 256
    $region29: #{tpu_custom_call.1} parent=1 // pred_fallthru
      _
    // Predicated region
    $region30: #{tpu_custom_call.1} parent=1 // pred_check
      _
    $region31: #{tpu_custom_call.1} parent=1 // pred_check_branch
      %60 = sbr.rel (0) target = $region33
    $region32: #{tpu_custom_call.1} parent=1 // pred_region
      %61 = dma.done [#allocation6], 1024
    $region33: #{tpu_custom_call.1} parent=1 // pred_fallthru
      _
    %v63 = vld [vmem:[#allocation2] sm:$0xff]
    %v64 = vld [vmem:[#allocation2 + $0x8] sm:$0xff]
    %v65 = vpack.c.bf16 %v64, %v63
    %v66 = vld [vmem:[#allocation5] sm:$0xf]
    %v67 = vld [vmem:[#allocation5 + $0x4] sm:$0xf]
    %v68 = vld [vmem:[#allocation5 + $0x8] sm:$0xf]
    %v69 = vld [vmem:[#allocation5 + $0xc] sm:$0xf]
    %v70 = vld [vmem:[%s2] sm:$0x1]
    %v72 = vlaneseq
    %v73 = vshrl.u32 %v72, 7
    %v74 = vsub.s32 0, %v73
    %v75 = vrot.slane %v70, %v74
    %v81 = vunpack.c.l.b16 %v66
    %v82 = vunpack.c.l.b16 %v67
    %v83 = vunpack.c.l.b16 %v68
    %v84 = vunpack.c.l.b16 %v69
    %v85 = vpack.c.b16 %v82, %v81
    %v86 = vpack.c.b16 %v84, %v83
    %vm89 = vcmask 261120
    %v91 = vsel %vm89, %v65, 0
    %93 = vmatprep.subr.bf16.mxu0 0
    %94 = vmatpush1.bf16.msra.mxu0 %v85
    %95 = vmatprep.subr.bf16.mxu0 0
    %96 = vmatpush1.bf16.msra.mxu0 %v86
    %97 = vmatprep.subr.bf16.mxu0 0
    %98 = vmatpush1.bf16.msra.mxu0 0
    %99 = vmatprep.subr.bf16.mxu0 0
    %100 = vmatpush1.bf16.msra.mxu0 0
    %101 = vmatprep.subr.bf16.mxu0 0
    %102 = vmatpush1.bf16.msra.mxu0 0
    %103 = vmatprep.subr.bf16.mxu0 0
    %104 = vmatpush1.bf16.msra.mxu0 0
    %105 = vmatprep.subr.bf16.mxu0 0
    %106 = vmatpush1.bf16.msra.mxu0 0
    %107 = vmatprep.subr.bf16.mxu0 0
    %108 = vmatpush1.bf16.msra.mxu0 0
    %109 = vmatprep.subr.bf16.mxu0 0
    %110 = vmatpush1.bf16.msra.mxu0 0
    %111 = vmatprep.subr.bf16.mxu0 0
    %112 = vmatpush1.bf16.msra.mxu0 0
    %113 = vmatprep.subr.bf16.mxu0 0
    %114 = vmatpush1.bf16.msra.mxu0 0
    %115 = vmatprep.subr.bf16.mxu0 0
    %116 = vmatpush1.bf16.msra.mxu0 0
    %117 = vmatprep.subr.bf16.mxu0 0
    %118 = vmatpush1.bf16.msra.mxu0 0
    %119 = vmatprep.subr.bf16.mxu0 0
    %120 = vmatpush1.bf16.msra.mxu0 0
    %121 = vmatprep.subr.bf16.mxu0 0
    %122 = vmatpush1.bf16.msra.mxu0 0
    %123 = vmatprep.subr.bf16.mxu0 0
    %124 = vmatpush1.bf16.msra.mxu0 0
    %125 = vmatprep.mubr.bf16.mxu0 0
    %126 = vmatmul.mubr.bf16.gmra.mrb[0].mxu0 %v91
    %v127 = vpop.f32.mrb[0].mxu0
    %v128 = vadd.f32 %v75, %v127
    %v129 = vpop.f32.mrb[0].mxu0
    %v130 = vpop.f32.mrb[0].mxu0
    %v131 = vadd.f32 %v75, %v130
    %v132 = vpop.f32.mrb[0].mxu0
    %133 = vdwg.mxu0
    %vm134 = vcmp.gt.f32.partialorder %v128, 0.0
    %vm135 = vcmp.gt.f32.partialorder %v131, 0.0
    %v136 = vmul.f32 %v128, 0.2
    %v137 = vmul.f32 %v131, 0.2
    %v138 = vsel %vm134, %v128, %v136
    %v139 = vsel %vm135, %v131, %v137
    %v140 = vpack.c.bf16 %v139, %v138
    %v141 = vld [vmem:[#allocation7] sm:$0xf]
    %v142 = vld [vmem:[#allocation7 + $0x4] sm:$0xf]
    %v143 = vld [vmem:[#allocation7 + $0x8] sm:$0xf]
    %v144 = vld [vmem:[#allocation7 + $0xc] sm:$0xf]
    %v145 = vld [vmem:[#allocation7 + $0x10] sm:$0xf]
    %v146 = vld [vmem:[#allocation7 + $0x14] sm:$0xf]
    %v147 = vld [vmem:[#allocation7 + $0x18] sm:$0xf]
    %v148 = vld [vmem:[#allocation7 + $0x1c] sm:$0xf]
    %v149 = vld [vmem:[#allocation7 + $0x20] sm:$0xf]
    %v150 = vld [vmem:[#allocation7 + $0x24] sm:$0xf]
    %v151 = vld [vmem:[#allocation7 + $0x28] sm:$0xf]
    %v152 = vld [vmem:[#allocation7 + $0x2c] sm:$0xf]
    %v153 = vld [vmem:[#allocation7 + $0x30] sm:$0xf]
    %v154 = vld [vmem:[#allocation7 + $0x34] sm:$0xf]
    %v155 = vld [vmem:[#allocation7 + $0x38] sm:$0xf]
    %v156 = vld [vmem:[#allocation7 + $0x3c] sm:$0xf]
    %v157 = vld [vmem:[%s4] sm:$0x1]
    %v159 = vlaneseq
    %v160 = vshrl.u32 %v159, 7
    %v161 = vsub.s32 0, %v160
    %v162 = vrot.slane %v157, %v161
    %v180 = vunpack.c.l.b16 %v141
    %v181 = vunpack.c.l.b16 %v142
    %v182 = vunpack.c.l.b16 %v143
    %v183 = vunpack.c.l.b16 %v144
    %v184 = vunpack.c.l.b16 %v145
    %v185 = vunpack.c.l.b16 %v146
    %v186 = vunpack.c.l.b16 %v147
    %v187 = vunpack.c.l.b16 %v148
    %v188 = vunpack.c.l.b16 %v149
    %v189 = vunpack.c.l.b16 %v150
    %v190 = vunpack.c.l.b16 %v151
    %v191 = vunpack.c.l.b16 %v152
    %v192 = vunpack.c.l.b16 %v153
    %v193 = vunpack.c.l.b16 %v154
    %v194 = vunpack.c.l.b16 %v155
    %v195 = vunpack.c.l.b16 %v156
    %v196 = vpack.c.b16 %v181, %v180
    %v197 = vpack.c.b16 %v183, %v182
    %v198 = vpack.c.b16 %v185, %v184
    %v199 = vpack.c.b16 %v187, %v186
    %v200 = vpack.c.b16 %v189, %v188
    %v201 = vpack.c.b16 %v191, %v190
    %v202 = vpack.c.b16 %v193, %v192
    %v203 = vpack.c.b16 %v195, %v194
    %212 = vmatprep.subr.bf16.mxu0 0
    %213 = vmatpush1.bf16.msra.mxu0 %v196
    %214 = vmatprep.subr.bf16.mxu0 0
    %215 = vmatpush1.bf16.msra.mxu0 %v197
    %216 = vmatprep.subr.bf16.mxu0 0
    %217 = vmatpush1.bf16.msra.mxu0 %v198
    %218 = vmatprep.subr.bf16.mxu0 0
    %219 = vmatpush1.bf16.msra.mxu0 %v199
    %220 = vmatprep.subr.bf16.mxu0 0
    %221 = vmatpush1.bf16.msra.mxu0 %v200
    %222 = vmatprep.subr.bf16.mxu0 0
    %223 = vmatpush1.bf16.msra.mxu0 %v201
    %224 = vmatprep.subr.bf16.mxu0 0
    %225 = vmatpush1.bf16.msra.mxu0 %v202
    %226 = vmatprep.subr.bf16.mxu0 0
    %227 = vmatpush1.bf16.msra.mxu0 %v203
    %228 = vmatprep.subr.bf16.mxu0 0
    %229 = vmatpush1.bf16.msra.mxu0 0
    %230 = vmatprep.subr.bf16.mxu0 0
    %231 = vmatpush1.bf16.msra.mxu0 0
    %232 = vmatprep.subr.bf16.mxu0 0
    %233 = vmatpush1.bf16.msra.mxu0 0
    %234 = vmatprep.subr.bf16.mxu0 0
    %235 = vmatpush1.bf16.msra.mxu0 0
    %236 = vmatprep.subr.bf16.mxu0 0
    %237 = vmatpush1.bf16.msra.mxu0 0
    %238 = vmatprep.subr.bf16.mxu0 0
    %239 = vmatpush1.bf16.msra.mxu0 0
    %240 = vmatprep.subr.bf16.mxu0 0
    %241 = vmatpush1.bf16.msra.mxu0 0
    %242 = vmatprep.subr.bf16.mxu0 0
    %243 = vmatpush1.bf16.msra.mxu0 0
    %244 = vmatprep.mubr.bf16.mxu0 0
    %245 = vmatmul.mubr.bf16.gmra.mrb[0].mxu0 %v140
    %v246 = vpop.f32.mrb[0].mxu0
    %v247 = vadd.f32 %v162, %v246
    %v248 = vpop.f32.mrb[0].mxu0
    %v249 = vpop.f32.mrb[0].mxu0
    %v250 = vadd.f32 %v162, %v249
    %v251 = vpop.f32.mrb[0].mxu0
    %252 = vdwg.mxu0
    %253 = vmax.xlane.f32.xlu0 %v247
    %v254 = vpop.xlane.xlu0 %253
    %255 = vmax.xlane.f32.xlu0 %v250
    %v256 = vpop.xlane.xlu0 %255
    %v257 = vsub.f32 %v247, %v254
    %v258 = vsub.f32 %v250, %v256
    %v259 = vmul.f32 %v257, 1.442695
    %v260 = vpow.pop %v259
    %v261 = vmul.f32 %v258, 1.442695
    %v262 = vpow.pop %v261
    %263 = vadd.xlane.f32.xlu0 %v260
    %v264 = vpop.xlane.xlu0 %263
    %265 = vadd.xlane.f32.xlu0 %v262
    %v266 = vpop.xlane.xlu0 %265
    %v267 = vrcp.pop %v264
    %v268 = vmul.f32 %v260, %v267
    %v269 = vrcp.pop %v266
    %v270 = vmul.f32 %v262, %v269
    %271 = vst [vmem:[#allocation8] sm:$0xff] %v268
    %272 = vst [vmem:[#allocation8 + $0x8] sm:$0xff] %v270
    // Predicated region
    $region34: #{tpu_custom_call.1} parent=1 // pred_check
      _
    $region35: #{tpu_custom_call.1} parent=1 // pred_check_branch
      %274 = sbr.rel (0) target = $region37
    $region36: #{tpu_custom_call.1} parent=1 // pred_region
      %s276 = ssub.s32 256, 128
      %277 = vsyncadd [#allocation4], %s276
      %s278 = sshll.u32 [#allocation8], 4
      %s279 = int_to_ptr.vmem [resolvable:$true] %s278
      %284 = dma.vmem_to_hbm [thread:$0]  %s279, 128, %s5, [#allocation4], 128, 128, 8
    $region37: #{tpu_custom_call.1} parent=1 // pred_fallthru
      _
    // Predicated region
    $region38: #{tpu_custom_call.1} parent=1 // pred_check
      _
    $region39: #{tpu_custom_call.1} parent=1 // pred_check_branch
      %286 = sbr.rel (0) target = $region41
    $region40: #{tpu_custom_call.1} parent=1 // pred_region
      %287 = dma.done [#allocation4], 256
    $region41: #{tpu_custom_call.1} parent=1 // pred_fallthru
      _
    %288 = vsyncpa [#allocation3], 1
    %289 = vsyncpa [#allocation6], 1
    %290 = vsyncpa [#allocation4], 1

</llo_original>
